<compile_context>
chip_gen: v7x
topology: tpu7x:2x2x1
jax: 0.10.0
libtpu: 0.0.40
codegen_flags: <defaults>
</compile_context>

<pallas_src>
import functools

import jax
import jax.numpy as jnp
from jax import lax
from jax.experimental import pallas as pl
from jax.experimental.pallas import tpu as pltpu


def shrinkage_kernel(x_ref, w_ref, b_ref, o_ref, *, inv_len):
    # x_ref block: (TB, C, Lp) -- a tile of batch elements (Lp = padded L).
    x = x_ref[...]                                   # (TB, C, Lp), native dtype

    # Global average pool of |x| over the TRUE length L (padded lanes are zero,
    # so they contribute nothing to the sum; inv_len = 1/L).
    avg = jnp.sum(jnp.abs(x).astype(jnp.float32), axis=-1) * inv_len   # (TB, C)

    # fc path, batched over the TB rows of the tile.
    # BatchNorm1d (inference) is already folded into w_ref[0] / b_ref[0].
    h = jnp.dot(avg, w_ref[0],
                preferred_element_type=jnp.float32) + b_ref[0:1, :]    # Linear 1 (+BN)
    h = jnp.maximum(h, 0.0)                                            # ReLU
    h = jnp.dot(h, w_ref[1],
                preferred_element_type=jnp.float32) + b_ref[1:2, :]    # Linear 2
    s = jax.nn.sigmoid(h)                                              # (TB, C)

    # Per-(batch, channel) threshold, broadcast over L.
    thr = (avg * s)[:, :, None]                      # (TB, C, 1) f32

    # Recompute |x| here instead of keeping a block-sized x_abs temp alive
    # across the FC chain (avoids a full-block VMEM temp + extra vst/vld).
    xf = x.astype(jnp.float32)
    n_sub = jnp.maximum(jnp.abs(xf) - thr, 0.0)      # soft-threshold magnitude

    # sign(x) * n_sub; n_sub == 0 wherever x == 0 (thr >= 0), so '>=' is exact.
    out = jnp.where(xf >= 0.0, n_sub, -n_sub)
    o_ref[...] = out.astype(o_ref.dtype)


def _device_profile():
    """Per-generation tuning knobs. Conservative (v7x-like) defaults if unknown."""
    kind = ""
    try:
        kind = jax.devices()[0].device_kind.lower()
    except Exception:
        pass
    if "v7" in kind:
        # 64 MiB VMEM per TensorCore, 2 TCs/chip, ~3.2 TB/s HBM.
        return {"block_target": 8 << 20, "vmem_phys": 64 << 20, "dual_tc": True}
    if "v6" in kind:
        return {"block_target": 8 << 20, "vmem_phys": 128 << 20, "dual_tc": False}
    if "v5" in kind:
        return {"block_target": 4 << 20, "vmem_phys": 128 << 20, "dual_tc": False}
    return {"block_target": 4 << 20, "vmem_phys": 64 << 20, "dual_tc": False}


def shrinkage(x, params, *, target_block_bytes=None):
    """Pallas Shrinkage forward. `params` are the raw (unfolded) module params.

    x: (B, C, L) float32 or bfloat16. Output matches x.dtype; math is f32.
    """
    B, C, L = x.shape
    w1t, b1, gamma, beta, mean, var, w2t, b2 = params

    # Fold inference-mode BatchNorm1d into the first Linear layer.
    scale = (gamma * lax.rsqrt(var + 1e-5)).astype(jnp.float32)        # (1, C)
    w1t_f = w1t.astype(jnp.float32) * scale          # scale output columns of W1^T
    b1_f = (b1.astype(jnp.float32) - mean) * scale + beta
    weights = jnp.stack([w1t_f, w2t.astype(jnp.float32)], axis=0)      # (2, C, C)
    biases = jnp.concatenate([b1_f, b2.astype(jnp.float32)], axis=0)   # (2, C)

    prof = _device_profile()
    if target_block_bytes is None:
        target_block_bytes = prof["block_target"]

    # Pad L to a lane-dense multiple of 128 so output stores are unmasked vst.
    # Zero padding is exact: the GAP divides by the true L, and padded lanes
    # produce 0 which is sliced off below.  L itself is NEVER tiled.
    l_pad = pl.cdiv(L, 128) * 128
    x_p = jnp.pad(x, ((0, 0), (0, 0), (0, l_pad - L))) if l_pad != L else x

    # Multi-batch tile: aim for target_block_bytes of x per block. All per-row
    # work is independent, so a padded partial last block is safe (writeback is
    # masked; garbage rows never mix with real rows).
    row_bytes = C * l_pad * x.dtype.itemsize
    tb = int(max(1, min(B, target_block_bytes // max(row_bytes, 1))))
    # Round tb down to a sublane multiple so the (TB, C) FC operands need no relayout.
    sub = 16 if x.dtype == jnp.bfloat16 else 8
    if tb >= sub:
        tb = (tb // sub) * sub
    # Only v7x has 2 TensorCores that a "parallel" grid axis shards across;
    # on v5e/v6e a forced split is pure per-step overhead.
    if prof["dual_tc"] and B > 1 and pl.cdiv(B, tb) < 2:
        tb = pl.cdiv(B, 2)
    grid = (pl.cdiv(B, tb),)

    # Explicit scoped-VMEM limit: double-buffered input + output blocks plus
    # the resident weights, with headroom, capped below physical VMEM.
    block_bytes = tb * C * l_pad * x.dtype.itemsize
    param_bytes = int(weights.size + biases.size) * 4
    needed = 4 * block_bytes + 2 * param_bytes + (4 << 20)
    vmem_limit = int(min(prof["vmem_phys"] - (16 << 20), max(needed, 32 << 20)))

    out = pl.pallas_call(
        functools.partial(shrinkage_kernel, inv_len=1.0 / float(L)),
        out_shape=jax.ShapeDtypeStruct((B, C, l_pad), x.dtype),
        grid=grid,
        in_specs=[
            pl.BlockSpec((tb, C, l_pad), lambda b: (b, 0, 0)),   # x batch tile
            pl.BlockSpec((2, C, C), lambda b: (0, 0, 0)),        # packed W1'^T, W2^T
            pl.BlockSpec((2, C), lambda b: (0, 0)),              # packed b1', b2
        ],
        out_specs=pl.BlockSpec((tb, C, l_pad), lambda b: (b, 0, 0)),
        compiler_params=pltpu.CompilerParams(
            dimension_semantics=("parallel",),
            vmem_limit_bytes=vmem_limit,
        ),
    )(x_p, weights, biases)

    if l_pad != L:
        out = out[:, :, :L]
    return out


def shrinkage_ref(x, params):
    # Pure-JAX reference mirroring the PyTorch forward (BN in eval mode, unfolded).
    w1t, b1, gamma, beta, mean, var, w2t, b2 = params
    xf = x.astype(jnp.float32)
    x_abs = jnp.abs(xf)
    avg = jnp.mean(x_abs, axis=-1)                   # (B, C)
    h = avg @ w1t + b1
    h = (h - mean) * lax.rsqrt(var + 1e-5) * gamma + beta
    h = jnp.maximum(h, 0.0)
    h = h @ w2t + b2
    s = jax.nn.sigmoid(h)
    thr = (avg * s)[:, :, None]
    n_sub = jnp.maximum(x_abs - thr, 0.0)
    return (jnp.sign(xf) * n_sub).astype(x.dtype)


def init_params(key, C):
    k1, k2, k3, k4, k5, k6, k7 = jax.random.split(key, 7)
    w1 = jax.random.normal(k1, (C, C), jnp.float32) * 0.1   # Linear weight (out, in)
    b1 = jax.random.normal(k2, (1, C), jnp.float32) * 0.05
    w2 = jax.random.normal(k3, (C, C), jnp.float32) * 0.1
    b2 = jax.random.normal(k4, (1, C), jnp.float32) * 0.05
    gamma = 1.0 + 0.1 * jax.random.normal(k5, (1, C), jnp.float32)
    beta = 0.05 * jax.random.normal(k6, (1, C), jnp.float32)
    mean = 0.05 * jax.random.normal(k7, (1, C), jnp.float32)
    var = jnp.ones((1, C), jnp.float32)
    # Pre-transpose linear weights so the kernel does avg @ W^T directly.
    return (w1.T, b1, gamma, beta, mean, var, w2.T, b2)


if __name__ == "__main__":
    # Small deterministic test; L is deliberately not a multiple of 128 to
    # exercise the lane-dense padding path.
    B, C, L = 4, 8, 100
    key = jax.random.PRNGKey(0)
    kx, kp = jax.random.split(key)
    x = jax.random.normal(kx, (B, C, L), jnp.float32)
    params = init_params(kp, C)

    out = shrinkage(x, params)
    jax.block_until_ready(out)

    ref = shrinkage_ref(x, params)
    assert out.shape == (B, C, L)
    assert jnp.allclose(out, ref, atol=1e-5, rtol=1e-5), "mismatch vs reference"
    print("KERNEL_OK")
</pallas_src>

<mosaic_0001>
module attributes {stable_mosaic.version = 11 : i64} {
  func.func @shrinkage_kernel(%arg0: i32, %arg1: memref<4x8x128xf32, #tpu.memory_space<vmem>>, %arg2: memref<2x8x8xf32, #tpu.memory_space<vmem>>, %arg3: memref<2x8xf32, #tpu.memory_space<vmem>>, %arg4: memref<4x8x128xf32, #tpu.memory_space<vmem>>) attributes {dimension_semantics = [#tpu.dimension_semantics<parallel>], iteration_bounds = array<i64: 1>, scalar_prefetch = 0 : i64, scratch_operands = 0 : i64, tpu.core_type = #tpu.core_type<tc>, window_params = [{transform_indices = @transform_0, window_bounds = array<i64: 4, 8, 128>}, {pipeline_mode = #tpu.pipeline_mode<synchronous>, transform_indices = @transform_1, window_bounds = array<i64: 2, 8, 8>}, {pipeline_mode = #tpu.pipeline_mode<synchronous>, transform_indices = @transform_2, window_bounds = array<i64: 2, 8>}, {transform_indices = @transform_3, window_bounds = array<i64: 4, 8, 128>}]} {
    %c0 = arith.constant 0 : index
    %c0_0 = arith.constant 0 : index
    %c0_1 = arith.constant 0 : index
    %0 = vector.load %arg1[%c0, %c0_0, %c0_1] : memref<4x8x128xf32, #tpu.memory_space<vmem>>, vector<4x8x128xf32>
    %1 = math.absf %0 : vector<4x8x128xf32>
    %cst = arith.constant dense<0.000000e+00> : vector<4x8xf32>
    %2 = vector.multi_reduction <add>, %1, %cst [2] : vector<4x8x128xf32> to vector<4x8xf32>
    %cst_2 = arith.constant 0.00999999977 : f32
    %3 = vector.broadcast %cst_2 : f32 to vector<4x8xf32>
    %4 = arith.mulf %2, %3 : vector<4x8xf32>
    %c0_3 = arith.constant 0 : index
    %c0_4 = arith.constant 0 : index
    %c0_5 = arith.constant 0 : index
    %5 = vector.load %arg2[%c0_3, %c0_4, %c0_5] : memref<2x8x8xf32, #tpu.memory_space<vmem>>, vector<1x8x8xf32>
    %6 = vector.shape_cast %5 : vector<1x8x8xf32> to vector<8x8xf32>
    %cst_6 = arith.constant dense<0.000000e+00> : vector<4x8xf32>
    %7 = tpu.matmul %4, %6, %cst_6 {dimension_numbers = #tpu.dot_dimension_numbers<[1], [0], [0], [1], [0, 0, 1, 1], [], []>} : vector<4x8xf32>, vector<8x8xf32>, vector<4x8xf32> -> vector<4x8xf32>
    %c0_7 = arith.constant 0 : index
    %c0_8 = arith.constant 0 : index
    %8 = vector.load %arg3[%c0_7, %c0_8] : memref<2x8xf32, #tpu.memory_space<vmem>>, vector<1x8xf32>
    %9 = vector.broadcast %8 : vector<1x8xf32> to vector<4x8xf32>
    %10 = arith.addf %7, %9 : vector<4x8xf32>
    %cst_9 = arith.constant 0.000000e+00 : f32
    %11 = vector.broadcast %cst_9 : f32 to vector<4x8xf32>
    %12 = arith.maximumf %10, %11 : vector<4x8xf32>
    %c1 = arith.constant 1 : index
    %c0_10 = arith.constant 0 : index
    %c0_11 = arith.constant 0 : index
    %13 = vector.load %arg2[%c1, %c0_10, %c0_11] : memref<2x8x8xf32, #tpu.memory_space<vmem>>, vector<1x8x8xf32>
    %14 = vector.shape_cast %13 : vector<1x8x8xf32> to vector<8x8xf32>
    %cst_12 = arith.constant dense<0.000000e+00> : vector<4x8xf32>
    %15 = tpu.matmul %12, %14, %cst_12 {dimension_numbers = #tpu.dot_dimension_numbers<[1], [0], [0], [1], [0, 0, 1, 1], [], []>} : vector<4x8xf32>, vector<8x8xf32>, vector<4x8xf32> -> vector<4x8xf32>
    %c1_13 = arith.constant 1 : index
    %c0_14 = arith.constant 0 : index
    %16 = vector.load %arg3[%c1_13, %c0_14] : memref<2x8xf32, #tpu.memory_space<vmem>>, vector<1x8xf32>
    %17 = vector.broadcast %16 : vector<1x8xf32> to vector<4x8xf32>
    %18 = arith.addf %15, %17 : vector<4x8xf32>
    %19 = arith.negf %18 : vector<4x8xf32>
    %20 = math.exp %19 : vector<4x8xf32>
    %cst_15 = arith.constant 1.000000e+00 : f32
    %21 = vector.broadcast %cst_15 : f32 to vector<4x8xf32>
    %22 = arith.addf %21, %20 : vector<4x8xf32>
    %23 = arith.divf %21, %22 : vector<4x8xf32>
    %24 = arith.mulf %4, %23 : vector<4x8xf32>
    %25 = vector.shape_cast %24 : vector<4x8xf32> to vector<4x8x1xf32>
    %26 = math.absf %0 : vector<4x8x128xf32>
    %27 = vector.broadcast %25 : vector<4x8x1xf32> to vector<4x8x128xf32>
    %28 = arith.subf %26, %27 : vector<4x8x128xf32>
    %cst_16 = arith.constant 0.000000e+00 : f32
    %29 = vector.broadcast %cst_16 : f32 to vector<4x8x128xf32>
    %30 = arith.maximumf %28, %29 : vector<4x8x128xf32>
    %cst_17 = arith.constant 0.000000e+00 : f32
    %31 = vector.broadcast %cst_17 : f32 to vector<4x8x128xf32>
    %32 = arith.cmpf oge, %0, %31 : vector<4x8x128xf32>
    %cst_18 = arith.constant 0.000000e+00 : f32
    %33 = vector.broadcast %cst_18 : f32 to vector<4x8x128xf32>
    %34 = arith.subf %33, %30 : vector<4x8x128xf32>
    %35 = arith.select %32, %30, %34 : vector<4x8x128xi1>, vector<4x8x128xf32>
    %c0_19 = arith.constant 0 : index
    %c0_20 = arith.constant 0 : index
    %c0_21 = arith.constant 0 : index
    %36 = vector.load %arg4[%c0_19, %c0_20, %c0_21] : memref<4x8x128xf32, #tpu.memory_space<vmem>>, vector<4x8x128xf32>
    tpu.vector_store %arg4[%c0_19, %c0_20, %c0_21], %35 {strides = array<i32>} : memref<4x8x128xf32, #tpu.memory_space<vmem>>, vector<4x8x128xf32>,
    return
  }
  func.func @transform_0(%arg0: i32) -> (i32, i32, i32) {
    %c0_i32 = arith.constant 0 : i32
    %c0_i32_0 = arith.constant 0 : i32
    %c0_i32_1 = arith.constant 0 : i32
    return %arg0, %c0_i32, %c0_i32_0 : i32, i32, i32
  }
  func.func @transform_1(%arg0: i32) -> (i32, i32, i32) {
    %c0_i32 = arith.constant 0 : i32
    %c0_i32_0 = arith.constant 0 : i32
    %c0_i32_1 = arith.constant 0 : i32
    %c0_i32_2 = arith.constant 0 : i32
    return %c0_i32, %c0_i32_0, %c0_i32_1 : i32, i32, i32
  }
  func.func @transform_2(%arg0: i32) -> (i32, i32) {
    %c0_i32 = arith.constant 0 : i32
    %c0_i32_0 = arith.constant 0 : i32
    %c0_i32_1 = arith.constant 0 : i32
    return %c0_i32, %c0_i32_0 : i32, i32
  }
  func.func @transform_3(%arg0: i32) -> (i32, i32, i32) {
    %c0_i32 = arith.constant 0 : i32
    %c0_i32_0 = arith.constant 0 : i32
    %c0_i32_1 = arith.constant 0 : i32
    return %arg0, %c0_i32, %c0_i32_0 : i32, i32, i32
  }
}

</mosaic_0001>

<llo_original>
// kernel: tpu_custom_call.1
$region0: #{tpu_custom_call.1}
  #allocation0 [shape = 'u32[]', space=smem, size = 0x4, offset = 0x4, fixed_abs, tag = 'smem constant byte address 0x4 - core index']
  #allocation1 [shape = 'u32[144,128]{1,0:T(1,128)}', space=vmem, size = 0x12000, scoped, tag = 'internal scratch']
  %s0 = inlined_call_operand.hbm [shape: f32[4,8,128], index: 0, kind: input, shape index: {}]
  %s1 = inlined_call_operand.hbm [shape: f32[2,8,8], index: 1, kind: input, shape index: {}]
  %s2 = inlined_call_operand.vmem [shape: f32[2,8], index: 2, kind: input, shape index: {}]
  %s3 = inlined_call_operand.hbm [shape: f32[4,8,128], index: 3, kind: output, shape index: {}]
  %s4 = sld [smem:[#allocation0]]
  $region30: #{tpu_custom_call.1} parent=0
    _
  %s6 = ssub.s32 1, %s4
  %s7 = scalar_select 0, %s6, %s4
  $region1: #{tpu_custom_call.1} parent=0
    #allocation2 [shape = 'u8[16384]{0}', space=vmem, size = 0x4000, scoped, tag = 'input window, operand 0, single buffered']
    #allocation3 [shape = 's32[1]{0}', space=sflag, size = 0x4, scoped, tag = 'scoped memory for tpu_custom_call.1']
    #allocation4 [shape = 's32[1]{0}', space=sflag, size = 0x4, scoped, tag = 'scoped memory for tpu_custom_call.1']
    #allocation5 [shape = 'u8[8192]{0}', space=vmem, size = 0x2000, scoped, tag = 'input window, operand 1, single buffered']
    #allocation6 [shape = 's32[1]{0}', space=sflag, size = 0x4, scoped, tag = 'scoped memory for tpu_custom_call.1']
    #allocation7 [shape = 'u8[16384]{0}', space=vmem, size = 0x4000, scoped, tag = 'output window, operand 0, single buffered']
    %8 = vsyncpa [#allocation3], 0
    %9 = vsyncpa [#allocation6], 0
    %10 = vsyncpa [#allocation4], 0
    // Predicated region
    $region2: #{tpu_custom_call.1} parent=1 // pred_check
      _
    $region3: #{tpu_custom_call.1} parent=1 // pred_check_branch
      %12 = sbr.rel (0) target = $region5
    $region4: #{tpu_custom_call.1} parent=1 // pred_region
      %s14 = ssub.s32 512, 512
      %15 = vsyncadd [#allocation3], %s14
      %s16 = sshll.u32 [#allocation2], 4
      %s17 = int_to_ptr.vmem [resolvable:$true] %s16
      %22 = dma.hbm_to_vmem [thread:$0]  %s0, 512, %s17, [#allocation3], 128, 128, 8
    $region5: #{tpu_custom_call.1} parent=1 // pred_fallthru
      _
    // Predicated region
    $region6: #{tpu_custom_call.1} parent=1 // pred_check
      _
    $region7: #{tpu_custom_call.1} parent=1 // pred_check_branch
      %24 = sbr.rel (0) target = $region9
    $region8: #{tpu_custom_call.1} parent=1 // pred_region
      %s26 = ssub.s32 256, 256
      %27 = vsyncadd [#allocation6], %s26
      %s28 = sshll.u32 [#allocation5], 4
      %s29 = int_to_ptr.vmem [resolvable:$true] %s28
      %34 = dma.hbm_to_vmem [thread:$0]  %s1, 256, %s29, [#allocation6], 128, 128, 8
    $region9: #{tpu_custom_call.1} parent=1 // pred_fallthru
      _
    // Predicated region
    $region10: #{tpu_custom_call.1} parent=1 // pred_check
      _
    $region11: #{tpu_custom_call.1} parent=1 // pred_check_branch
      %36 = sbr.rel (0) target = $region13
    $region12: #{tpu_custom_call.1} parent=1 // pred_region
      _
    $region13: #{tpu_custom_call.1} parent=1 // pred_fallthru
      _
    // Predicated region
    $region14: #{tpu_custom_call.1} parent=1 // pred_check
      _
    $region15: #{tpu_custom_call.1} parent=1 // pred_check_branch
      %38 = sbr.rel (0) target = $region17
    $region16: #{tpu_custom_call.1} parent=1 // pred_region
      %39 = dma.done [#allocation3], 512
    $region17: #{tpu_custom_call.1} parent=1 // pred_fallthru
      _
    // Predicated region
    $region18: #{tpu_custom_call.1} parent=1 // pred_check
      _
    $region19: #{tpu_custom_call.1} parent=1 // pred_check_branch
      %41 = sbr.rel (0) target = $region21
    $region20: #{tpu_custom_call.1} parent=1 // pred_region
      %42 = dma.done [#allocation6], 256
    $region21: #{tpu_custom_call.1} parent=1 // pred_fallthru
      _
    %v43 = vld [vmem:[#allocation2] sm:$0xff]
    %v44 = vld [vmem:[#allocation2 + $0x8] sm:$0xff]
    %v45 = vld [vmem:[#allocation2 + $0x10] sm:$0xff]
    %v46 = vld [vmem:[#allocation2 + $0x18] sm:$0xff]
    %v47 = vand.u32 2147483647, %v43
    %v48 = vand.u32 2147483647, %v44
    %v49 = vand.u32 2147483647, %v45
    %v50 = vand.u32 2147483647, %v46
    %51 = vadd.xlane.f32.xlu0 %v47
    %v52 = vpop.xlane.xlu0 %51
    %53 = vadd.xlane.f32.xlu0 %v48
    %v54 = vpop.xlane.xlu0 %53
    %55 = vadd.xlane.f32.xlu0 %v49
    %v56 = vpop.xlane.xlu0 %55
    %57 = vadd.xlane.f32.xlu0 %v50
    %v58 = vpop.xlane.xlu0 %57
    %v59 = vmul.f32 %v52, 0.01
    %v60 = vmul.f32 %v54, 0.01
    %v61 = vmul.f32 %v56, 0.01
    %v62 = vmul.f32 %v58, 0.01
    %v63 = vld [vmem:[#allocation5] sm:$0xff]
    %v64 = vld [vmem:[%s2] sm:$0x1]
    %v65 = vlaneseq
    %v66 = vshrl.u32 %v65, 7
    %v67 = vsub.s32 0, %v66
    %v68 = vrot.slane %v64, %v67
    %v73 = vlaneseq
    %v74 = vand.u32 %v73, 127
    %v75 = vlaneseq
    %v76 = vshrl.u32 %v75, 7
    %v77 = vsub.s32 %v74, %v76
    %v78 = vrot.slane %v59, %v77
    %v79 = vlaneseq
    %v80 = vshrl.u32 %v79, 7
    %v81 = vsub.s32 %v74, %v80
    %v82 = vrot.slane %v60, %v81
    %v83 = vlaneseq
    %v84 = vshrl.u32 %v83, 7
    %v85 = vsub.s32 %v74, %v84
    %v86 = vrot.slane %v61, %v85
    %v87 = vlaneseq
    %v88 = vshrl.u32 %v87, 7
    %v89 = vsub.s32 %v74, %v88
    %v90 = vrot.slane %v62, %v89
    %vm91 = vcmask 1041409
    %v92 = vsel %vm91, %v82, %v78
    %vm93 = vcmask 1042434
    %v94 = vsel %vm93, %v86, %v92
    %vm95 = vcmask 1043459
    %v96 = vsel %vm95, %v90, %v94
    %vm97 = vcmask 64512
    %v98 = vsel %vm97, %v96, 0
    %100 = vmatprep.subr.mxu0 0.0
    %101 = vmatpush1.msra.mxu0 %v63
    %102 = vmatprep.subr.mxu0 0.0
    %103 = vmatpush1.msra.mxu0 0.0
    %104 = vmatprep.subr.mxu0 0.0
    %105 = vmatpush1.msra.mxu0 0.0
    %106 = vmatprep.subr.mxu0 0.0
    %107 = vmatpush1.msra.mxu0 0.0
    %108 = vmatprep.subr.mxu0 0.0
    %109 = vmatpush1.msra.mxu0 0.0
    %110 = vmatprep.subr.mxu0 0.0
    %111 = vmatpush1.msra.mxu0 0.0
    %112 = vmatprep.subr.mxu0 0.0
    %113 = vmatpush1.msra.mxu0 0.0
    %114 = vmatprep.subr.mxu0 0.0
    %115 = vmatpush1.msra.mxu0 0.0
    %116 = vmatprep.subr.mxu0 0.0
    %117 = vmatpush1.msra.mxu0 0.0
    %118 = vmatprep.subr.mxu0 0.0
    %119 = vmatpush1.msra.mxu0 0.0
    %120 = vmatprep.subr.mxu0 0.0
    %121 = vmatpush1.msra.mxu0 0.0
    %122 = vmatprep.subr.mxu0 0.0
    %123 = vmatpush1.msra.mxu0 0.0
    %124 = vmatprep.subr.mxu0 0.0
    %125 = vmatpush1.msra.mxu0 0.0
    %126 = vmatprep.subr.mxu0 0.0
    %127 = vmatpush1.msra.mxu0 0.0
    %128 = vmatprep.subr.mxu0 0.0
    %129 = vmatpush1.msra.mxu0 0.0
    %130 = vmatprep.subr.mxu0 0.0
    %131 = vmatpush1.msra.mxu0 0.0
    %132 = vmatprep.subr.mxu0 0.0
    %133 = vmatpush1.msra.mxu0 0.0
    %134 = vmatprep.subr.mxu0 0.0
    %135 = vmatpush1.msra.mxu0 0.0
    %136 = vmatprep.subr.mxu0 0.0
    %137 = vmatpush1.msra.mxu0 0.0
    %138 = vmatprep.subr.mxu0 0.0
    %139 = vmatpush1.msra.mxu0 0.0
    %140 = vmatprep.subr.mxu0 0.0
    %141 = vmatpush1.msra.mxu0 0.0
    %142 = vmatprep.subr.mxu0 0.0
    %143 = vmatpush1.msra.mxu0 0.0
    %144 = vmatprep.subr.mxu0 0.0
    %145 = vmatpush1.msra.mxu0 0.0
    %146 = vmatprep.subr.mxu0 0.0
    %147 = vmatpush1.msra.mxu0 0.0
    %148 = vmatprep.subr.mxu0 0.0
    %149 = vmatpush1.msra.mxu0 0.0
    %150 = vmatprep.subr.mxu0 0.0
    %151 = vmatpush1.msra.mxu0 0.0
    %152 = vmatprep.subr.mxu0 0.0
    %153 = vmatpush1.msra.mxu0 0.0
    %154 = vmatprep.subr.mxu0 0.0
    %155 = vmatpush1.msra.mxu0 0.0
    %156 = vmatprep.subr.mxu0 0.0
    %157 = vmatpush1.msra.mxu0 0.0
    %158 = vmatprep.subr.mxu0 0.0
    %159 = vmatpush1.msra.mxu0 0.0
    %160 = vmatprep.subr.mxu0 0.0
    %161 = vmatpush1.msra.mxu0 0.0
    %162 = vmatprep.subr.mxu0 0.0
    %163 = vmatpush1.msra.mxu0 0.0
    %164 = vmatprep.mubr.f32.mxu0 0.0
    %165 = vmatmul.mubr.f32.gmra.mrb[0].mxu0 %v98
    %v166 = vpop.f32.mrb[0].mxu0
    %v167 = vadd.f32 %v68, %v166
    %v168 = vpop.f32.mrb[0].mxu0
    %169 = vdwg.mxu0
    %v170 = vmax.f32 %v167, 0.0
    %s171 = scalar_lea.vmem [#allocation5], 8
    %v172 = vld [vmem:[%s171] sm:$0xff]
    %v173 = vld [vmem:[%s2 + $0x1] sm:$0x1]
    %v174 = vlaneseq
    %v175 = vshrl.u32 %v174, 7
    %v176 = vsub.s32 0, %v175
    %v177 = vrot.slane %v173, %v176
    %v179 = vsel %vm97, %v170, 0
    %181 = vmatprep.subr.mxu0 0.0
    %182 = vmatpush1.msra.mxu0 %v172
    %183 = vmatprep.subr.mxu0 0.0
    %184 = vmatpush1.msra.mxu0 0.0
    %185 = vmatprep.subr.mxu0 0.0
    %186 = vmatpush1.msra.mxu0 0.0
    %187 = vmatprep.subr.mxu0 0.0
    %188 = vmatpush1.msra.mxu0 0.0
    %189 = vmatprep.subr.mxu0 0.0
    %190 = vmatpush1.msra.mxu0 0.0
    %191 = vmatprep.subr.mxu0 0.0
    %192 = vmatpush1.msra.mxu0 0.0
    %193 = vmatprep.subr.mxu0 0.0
    %194 = vmatpush1.msra.mxu0 0.0
    %195 = vmatprep.subr.mxu0 0.0
    %196 = vmatpush1.msra.mxu0 0.0
    %197 = vmatprep.subr.mxu0 0.0
    %198 = vmatpush1.msra.mxu0 0.0
    %199 = vmatprep.subr.mxu0 0.0
    %200 = vmatpush1.msra.mxu0 0.0
    %201 = vmatprep.subr.mxu0 0.0
    %202 = vmatpush1.msra.mxu0 0.0
    %203 = vmatprep.subr.mxu0 0.0
    %204 = vmatpush1.msra.mxu0 0.0
    %205 = vmatprep.subr.mxu0 0.0
    %206 = vmatpush1.msra.mxu0 0.0
    %207 = vmatprep.subr.mxu0 0.0
    %208 = vmatpush1.msra.mxu0 0.0
    %209 = vmatprep.subr.mxu0 0.0
    %210 = vmatpush1.msra.mxu0 0.0
    %211 = vmatprep.subr.mxu0 0.0
    %212 = vmatpush1.msra.mxu0 0.0
    %213 = vmatprep.subr.mxu0 0.0
    %214 = vmatpush1.msra.mxu0 0.0
    %215 = vmatprep.subr.mxu0 0.0
    %216 = vmatpush1.msra.mxu0 0.0
    %217 = vmatprep.subr.mxu0 0.0
    %218 = vmatpush1.msra.mxu0 0.0
    %219 = vmatprep.subr.mxu0 0.0
    %220 = vmatpush1.msra.mxu0 0.0
    %221 = vmatprep.subr.mxu0 0.0
    %222 = vmatpush1.msra.mxu0 0.0
    %223 = vmatprep.subr.mxu0 0.0
    %224 = vmatpush1.msra.mxu0 0.0
    %225 = vmatprep.subr.mxu0 0.0
    %226 = vmatpush1.msra.mxu0 0.0
    %227 = vmatprep.subr.mxu0 0.0
    %228 = vmatpush1.msra.mxu0 0.0
    %229 = vmatprep.subr.mxu0 0.0
    %230 = vmatpush1.msra.mxu0 0.0
    %231 = vmatprep.subr.mxu0 0.0
    %232 = vmatpush1.msra.mxu0 0.0
    %233 = vmatprep.subr.mxu0 0.0
    %234 = vmatpush1.msra.mxu0 0.0
    %235 = vmatprep.subr.mxu0 0.0
    %236 = vmatpush1.msra.mxu0 0.0
    %237 = vmatprep.subr.mxu0 0.0
    %238 = vmatpush1.msra.mxu0 0.0
    %239 = vmatprep.subr.mxu0 0.0
    %240 = vmatpush1.msra.mxu0 0.0
    %241 = vmatprep.subr.mxu0 0.0
    %242 = vmatpush1.msra.mxu0 0.0
    %243 = vmatprep.subr.mxu0 0.0
    %244 = vmatpush1.msra.mxu0 0.0
    %245 = vmatprep.mubr.f32.mxu0 0.0
    %246 = vmatmul.mubr.f32.gmra.mrb[0].mxu0 %v179
    %v247 = vpop.f32.mrb[0].mxu0
    %v248 = vadd.f32 %v177, %v247
    %v249 = vpop.f32.mrb[0].mxu0
    %250 = vdwg.mxu0
    %v251 = vxor.u32 %v248, 2147483648
    %v252 = vmul.f32 %v251, 1.442695
    %v253 = vpow.pop %v252
    %v254 = vadd.f32 %v253, 1.0
    %v255 = vrcp.pop %v254
    %v256 = vmul.f32 1.0, %v255
    %v258 = vlaneseq
    %v259 = vshrl.u32 %v258, 7
    %v260 = vsub.s32 0, %v259
    %v261 = vrot.slane %v256, %v260
    %263 = vbcast.lane.b32.xlu0 %v261, 256
    %v264 = vpop.permute.xlu0 %263
    %v265 = vlaneseq
    %v266 = vshrl.u32 %v265, 7
    %v267 = vsub.s32 1, %v266
    %v268 = vrot.slane %v256, %v267
    %270 = vbcast.lane.b32.xlu0 %v268, 256
    %v271 = vpop.permute.xlu0 %270
    %v272 = vlaneseq
    %v273 = vshrl.u32 %v272, 7
    %v274 = vsub.s32 2, %v273
    %v275 = vrot.slane %v256, %v274
    %277 = vbcast.lane.b32.xlu0 %v275, 256
    %v278 = vpop.permute.xlu0 %277
    %v279 = vlaneseq
    %v280 = vshrl.u32 %v279, 7
    %v281 = vsub.s32 3, %v280
    %v282 = vrot.slane %v256, %v281
    %284 = vbcast.lane.b32.xlu0 %v282, 256
    %v285 = vpop.permute.xlu0 %284
    %v290 = vmul.f32 %v59, %v264
    %v291 = vmul.f32 %v60, %v271
    %v292 = vmul.f32 %v61, %v278
    %v293 = vmul.f32 %v62, %v285
    %295 = vset.pattern.permute.xlu0 0
    %296 = vperm.xlu0 %295, %v290
    %v297 = vpop.permute.xlu0 %296
    %300 = vset.pattern.permute.xlu0 0
    %301 = vperm.xlu0 %300, %v291
    %v302 = vpop.permute.xlu0 %301
    %305 = vset.pattern.permute.xlu0 0
    %306 = vperm.xlu0 %305, %v292
    %v307 = vpop.permute.xlu0 %306
    %310 = vset.pattern.permute.xlu0 0
    %311 = vperm.xlu0 %310, %v293
    %v312 = vpop.permute.xlu0 %311
    %v314 = vsub.f32 %v47, %v297
    %v315 = vsub.f32 %v48, %v302
    %v316 = vsub.f32 %v49, %v307
    %v317 = vsub.f32 %v50, %v312
    %v318 = vmax.f32 %v314, 0.0
    %v319 = vmax.f32 %v315, 0.0
    %v320 = vmax.f32 %v316, 0.0
    %v321 = vmax.f32 %v317, 0.0
    %vm322 = vcmp.ge.f32.partialorder %v43, 0.0
    %vm323 = vcmp.ge.f32.partialorder %v44, 0.0
    %vm324 = vcmp.ge.f32.partialorder %v45, 0.0
    %vm325 = vcmp.ge.f32.partialorder %v46, 0.0
    %v326 = vsub.f32 0.0, %v318
    %v327 = vsub.f32 0.0, %v319
    %v328 = vsub.f32 0.0, %v320
    %v329 = vsub.f32 0.0, %v321
    %v330 = vsel %vm322, %v318, %v326
    %v331 = vsel %vm323, %v319, %v327
    %v332 = vsel %vm324, %v320, %v328
    %v333 = vsel %vm325, %v321, %v329
    %334 = vst [vmem:[#allocation7] sm:$0xff] %v330
    %335 = vst [vmem:[#allocation7 + $0x8] sm:$0xff] %v331
    %336 = vst [vmem:[#allocation7 + $0x10] sm:$0xff] %v332
    %337 = vst [vmem:[#allocation7 + $0x18] sm:$0xff] %v333
    // Predicated region
    $region22: #{tpu_custom_call.1} parent=1 // pred_check
      _
    $region23: #{tpu_custom_call.1} parent=1 // pred_check_branch
      %339 = sbr.rel (0) target = $region25
    $region24: #{tpu_custom_call.1} parent=1 // pred_region
      %s341 = ssub.s32 512, 512
      %342 = vsyncadd [#allocation4], %s341
      %s343 = sshll.u32 [#allocation7], 4
      %s344 = int_to_ptr.vmem [resolvable:$true] %s343
      %349 = dma.vmem_to_hbm [thread:$0]  %s344, 512, %s3, [#allocation4], 128, 128, 8
    $region25: #{tpu_custom_call.1} parent=1 // pred_fallthru
      _
    // Predicated region
    $region26: #{tpu_custom_call.1} parent=1 // pred_check
      _
    $region27: #{tpu_custom_call.1} parent=1 // pred_check_branch
      %351 = sbr.rel (0) target = $region29
    $region28: #{tpu_custom_call.1} parent=1 // pred_region
      %352 = dma.done [#allocation4], 512
    $region29: #{tpu_custom_call.1} parent=1 // pred_fallthru
      _
    %353 = vsyncpa [#allocation3], 1
    %354 = vsyncpa [#allocation6], 1
    %355 = vsyncpa [#allocation4], 1

</llo_original>
